<compile_context>
chip_gen: v7x
topology: tpu7x:2x2x1
jax: 0.10.0
libtpu: 0.0.40
codegen_flags: <defaults>
</compile_context>

<pallas_src>
import jax
import jax.numpy as jnp
from jax.experimental import pallas as pl
from jax.experimental.pallas import tpu as pltpu


def _affine_kernel(sb_ref, x_ref, o_ref):
    # sb_ref: (2,) float32 in SMEM -> [scale, bias]
    s = sb_ref[0]
    b = sb_ref[1]
    o_ref[...] = (x_ref[...].astype(jnp.float32) * s + b).astype(o_ref.dtype)


_LANE_WIDTHS = (4096, 2048, 1024, 512, 256, 128)
# ~4 MiB blocks: 2x in + 2x out double-buffered = 16 MiB, under the 32 MiB
# scoped limit and safely inside v7x's 64 MiB-per-TC physical VMEM, while
# sitting at the measured 85%+ HBM-roofline point with few grid steps.
_TARGET_BLOCK_BYTES = 4 * 1024 * 1024


def _cdiv(a, b):
    return -(-a // b)


def _choose_layout(n_elem, itemsize):
    """Pick (main_elems, rows, lane_width, tile_rows) for a lane-dense slab."""
    # Prefer the widest lane width that divides n_elem AND keeps rows a
    # multiple of 8 (sublane-dense vregs, unmasked stores).
    width = None
    for w in _LANE_WIDTHS:
        if n_elem % w == 0 and (n_elem // w) % 8 == 0:
            width = w
            break
    if width is None:
        for w in _LANE_WIDTHS:
            if n_elem % w == 0:
                width = w
                break
    if width is None:
        # Ragged: kernel covers the largest 128-divisible prefix; the sub-128
        # tail is handled by a tiny XLA epilogue (no full-tensor pad/slice).
        width = 128

    main = (n_elem // width) * width
    rows = main // width
    if rows == 0:
        return 0, 0, width, 0

    if rows < 8:
        # Single full-extent block (legal: block dim equals full array dim).
        return main, rows, width, rows

    # Row tile: largest multiple-of-8 tile with block <= ~4 MiB; partial final
    # block (if rows % tr != 0) is masked by Pallas -- no row padding.
    tr_cap = max(8, (_TARGET_BLOCK_BYTES // (width * itemsize)) // 8 * 8)
    tr = min(tr_cap, (rows // 8) * 8)

    # v7x megacore: if the whole slab fits one block, split into >=2 (>=4 for
    # bigger slabs) grid steps so both TensorCores' DMA engines stream HBM.
    if _cdiv(rows, tr) == 1 and rows >= 16:
        target_steps = 4 if rows >= 32 else 2
        tr = max(8, ((_cdiv(rows, target_steps) + 7) // 8) * 8)

    return main, rows, width, tr


def learnable_affine_block(x, scale, bias):
    """y = scale * x + bias, elementwise, scalar scale/bias (any input shape)."""
    orig_shape = x.shape
    orig_dtype = x.dtype
    n_elem = x.size
    itemsize = jnp.dtype(orig_dtype).itemsize

    # Parameters stay float32 regardless of activation dtype; packed into one
    # (2,) SMEM operand.
    scale32 = jnp.asarray(scale, jnp.float32).reshape(())
    bias32 = jnp.asarray(bias, jnp.float32).reshape(())
    sb = jnp.stack([scale32, bias32])

    main, rows, width, tr = _choose_layout(n_elem, itemsize)

    x_flat = x.reshape(-1)
    pieces = []

    if rows > 0:
        x_main = x_flat if main == n_elem else x_flat[:main]
        x2d = x_main.reshape(rows, width)
        n_blocks = _cdiv(rows, tr)

        out2d = pl.pallas_call(
            _affine_kernel,
            out_shape=jax.ShapeDtypeStruct((rows, width), orig_dtype),
            grid=(n_blocks,),
            in_specs=[
                pl.BlockSpec(memory_space=pltpu.SMEM),        # [scale, bias] f32
                pl.BlockSpec((tr, width), lambda i: (i, 0)),  # x tile
            ],
            out_specs=pl.BlockSpec((tr, width), lambda i: (i, 0)),
            compiler_params=pltpu.CompilerParams(
                # "parallel" shards the row-tile axis across both TCs on v7x;
                # near-zero cost on single-TC v5e/v6e.
                dimension_semantics=("parallel",),
                vmem_limit_bytes=32 * 1024 * 1024,
            ),
        )(sb, x2d)
        pieces.append(out2d.reshape(-1))

    tail = n_elem - main
    if tail:
        # Tiny (< lane-width) ragged tail: plain XLA, fuses cheaply.
        x_tail = x_flat[main:]
        pieces.append(
            (x_tail.astype(jnp.float32) * scale32 + bias32).astype(orig_dtype)
        )

    y_flat = pieces[0] if len(pieces) == 1 else jnp.concatenate(pieces)
    return y_flat.reshape(orig_shape)


if __name__ == "__main__":
    key = jax.random.PRNGKey(0)

    # Input: NCHW, small shape (conv-style activations as in HGNetV2).
    x = jax.random.normal(key, (2, 4, 16, 16), dtype=jnp.float32)

    # Parameter init follows the module (scalar scale_value / bias_value);
    # non-trivial values so the affine is observable.
    scale_value = 1.5
    bias_value = -0.25
    scale = jnp.array([scale_value], dtype=jnp.float32)
    bias = jnp.array([bias_value], dtype=jnp.float32)

    y = learnable_affine_block(x, scale, bias)
    y = jax.block_until_ready(y)

    y_ref = scale_value * x + bias_value
    assert y.shape == (2, 4, 16, 16) and y.dtype == jnp.float32
    assert jnp.allclose(y, y_ref, atol=1e-6, rtol=1e-6)

    print("KERNEL_OK")
</pallas_src>

<mosaic_0001>
module attributes {stable_mosaic.version = 11 : i64} {
  func.func @_affine_kernel(%arg0: i32, %arg1: memref<2xf32, #tpu.memory_space<smem>>, %arg2: memref<8x256xf32, #tpu.memory_space<vmem>>, %arg3: memref<8x256xf32, #tpu.memory_space<vmem>>) attributes {dimension_semantics = [#tpu.dimension_semantics<parallel>], iteration_bounds = array<i64: 1>, scalar_prefetch = 0 : i64, scratch_operands = 0 : i64, tpu.core_type = #tpu.core_type<tc>, window_params = [{transform_indices = @transform_0, window_bounds = array<i64: 2>}, {transform_indices = @transform_1, window_bounds = array<i64: 8, 256>}, {transform_indices = @transform_2, window_bounds = array<i64: 8, 256>}]} {
    %c0 = arith.constant 0 : index
    %0 = memref.load %arg1[%c0] : memref<2xf32, #tpu.memory_space<smem>>
    %c1 = arith.constant 1 : index
    %1 = memref.load %arg1[%c1] : memref<2xf32, #tpu.memory_space<smem>>
    %c0_0 = arith.constant 0 : index
    %c0_1 = arith.constant 0 : index
    %2 = vector.load %arg2[%c0_0, %c0_1] : memref<8x256xf32, #tpu.memory_space<vmem>>, vector<8x256xf32>
    %3 = vector.broadcast %0 : f32 to vector<8x256xf32>
    %4 = arith.mulf %2, %3 : vector<8x256xf32>
    %5 = vector.broadcast %1 : f32 to vector<8x256xf32>
    %6 = arith.addf %4, %5 : vector<8x256xf32>
    %c0_2 = arith.constant 0 : index
    %c0_3 = arith.constant 0 : index
    %7 = vector.load %arg3[%c0_2, %c0_3] : memref<8x256xf32, #tpu.memory_space<vmem>>, vector<8x256xf32>
    tpu.vector_store %arg3[%c0_2, %c0_3], %6 {strides = array<i32>} : memref<8x256xf32, #tpu.memory_space<vmem>>, vector<8x256xf32>,
    return
  }
  func.func @transform_0(%arg0: i32) -> i32 {
    %c0_i32 = arith.constant 0 : i32
    %c0_i32_0 = arith.constant 0 : i32
    return %c0_i32 : i32
  }
  func.func @transform_1(%arg0: i32) -> (i32, i32) {
    %c0_i32 = arith.constant 0 : i32
    %c0_i32_0 = arith.constant 0 : i32
    return %arg0, %c0_i32 : i32, i32
  }
  func.func @transform_2(%arg0: i32) -> (i32, i32) {
    %c0_i32 = arith.constant 0 : i32
    %c0_i32_0 = arith.constant 0 : i32
    return %arg0, %c0_i32 : i32, i32
  }
}

</mosaic_0001>

<llo_original>
// kernel: tpu_custom_call.1
$region0: #{tpu_custom_call.1}
  #allocation0 [shape = 'u32[]', space=smem, size = 0x4, offset = 0x4, fixed_abs, tag = 'smem constant byte address 0x4 - core index']
  #allocation1 [shape = 'u32[144,128]{1,0:T(1,128)}', space=vmem, size = 0x12000, scoped, tag = 'internal scratch']
  %s0 = inlined_call_operand.hbm [shape: f32[2], index: 0, kind: input, shape index: {}]
  %s1 = inlined_call_operand.hbm [shape: f32[8,256], index: 1, kind: input, shape index: {}]
  %s2 = inlined_call_operand.hbm [shape: f32[8,256], index: 2, kind: output, shape index: {}]
  %s3 = sld [smem:[#allocation0]]
  $region26: #{tpu_custom_call.1} parent=0
    _
  %s5 = ssub.s32 1, %s3
  %s6 = scalar_select 0, %s5, %s3
  $region1: #{tpu_custom_call.1} parent=0
    #allocation2 [shape = 'u8[512]{0}', space=smem, size = 0x200, scoped, tag = 'input window, operand 0, single buffered']
    #allocation3 [shape = 's32[1]{0}', space=sflag, size = 0x4, scoped, tag = 'scoped memory for tpu_custom_call.1']
    #allocation4 [shape = 's32[1]{0}', space=sflag, size = 0x4, scoped, tag = 'scoped memory for tpu_custom_call.1']
    #allocation5 [shape = 's32[1]{0}', space=sflag, size = 0x4, scoped, tag = 'scoped memory for tpu_custom_call.1']
    #allocation6 [shape = 'u8[8192]{0}', space=vmem, size = 0x2000, scoped, tag = 'input window, operand 1, single buffered']
    #allocation7 [shape = 'u8[8192]{0}', space=vmem, size = 0x2000, scoped, tag = 'output window, operand 0, single buffered']
    %7 = vsyncpa [#allocation5], 0
    %8 = vsyncpa [#allocation3], 0
    %9 = vsyncpa [#allocation4], 0
    // Predicated region
    $region2: #{tpu_custom_call.1} parent=1 // pred_check
      _
    $region3: #{tpu_custom_call.1} parent=1 // pred_check_branch
      %11 = sbr.rel (0) target = $region5
    $region4: #{tpu_custom_call.1} parent=1 // pred_region
      %s13 = ssub.s32 16, 16
      %14 = vsyncadd [#allocation5], %s13
      %17 = dma.hbm_to_smem %s0, 16, [#allocation2], [#allocation5]
    $region5: #{tpu_custom_call.1} parent=1 // pred_fallthru
      _
    // Predicated region
    $region6: #{tpu_custom_call.1} parent=1 // pred_check
      _
    $region7: #{tpu_custom_call.1} parent=1 // pred_check_branch
      %19 = sbr.rel (0) target = $region9
    $region8: #{tpu_custom_call.1} parent=1 // pred_region
      %s21 = ssub.s32 256, 256
      %22 = vsyncadd [#allocation3], %s21
      %s24 = sshll.u32 [#allocation6], 4
      %s25 = int_to_ptr.vmem [resolvable:$true] %s24
      %27 = dma.hbm_to_vmem [thread:$0]  %s1, 256, %s25, [#allocation3]
    $region9: #{tpu_custom_call.1} parent=1 // pred_fallthru
      _
    // Predicated region
    $region10: #{tpu_custom_call.1} parent=1 // pred_check
      _
    $region11: #{tpu_custom_call.1} parent=1 // pred_check_branch
      %29 = sbr.rel (0) target = $region13
    $region12: #{tpu_custom_call.1} parent=1 // pred_region
      %30 = dma.done [#allocation5], 16
    $region13: #{tpu_custom_call.1} parent=1 // pred_fallthru
      _
    // Predicated region
    $region14: #{tpu_custom_call.1} parent=1 // pred_check
      _
    $region15: #{tpu_custom_call.1} parent=1 // pred_check_branch
      %32 = sbr.rel (0) target = $region17
    $region16: #{tpu_custom_call.1} parent=1 // pred_region
      %33 = dma.done [#allocation3], 256
    $region17: #{tpu_custom_call.1} parent=1 // pred_fallthru
      _
    %34 = sfence
    %s35 = sld [smem:[#allocation2]]
    %s36 = sld [smem:[#allocation2 + $0x1]]
    %v37 = vld [vmem:[#allocation6] sm:$0xff]
    %v38 = vld [vmem:[#allocation6 + $0x8] sm:$0xff]
    %v39 = vstv %s35
    %v40 = vmul.f32 %v37, %v39
    %v41 = vmul.f32 %v38, %v39
    %v42 = vstv %s36
    %v43 = vadd.f32 %v40, %v42
    %v44 = vadd.f32 %v41, %v42
    %45 = vst [vmem:[#allocation7] sm:$0xff] %v43
    %46 = vst [vmem:[#allocation7 + $0x8] sm:$0xff] %v44
    // Predicated region
    $region18: #{tpu_custom_call.1} parent=1 // pred_check
      _
    $region19: #{tpu_custom_call.1} parent=1 // pred_check_branch
      %48 = sbr.rel (0) target = $region21
    $region20: #{tpu_custom_call.1} parent=1 // pred_region
      %s50 = ssub.s32 256, 256
      %51 = vsyncadd [#allocation4], %s50
      %s53 = sshll.u32 [#allocation7], 4
      %s54 = int_to_ptr.vmem [resolvable:$true] %s53
      %56 = dma.vmem_to_hbm [thread:$0]  %s54, 256, %s2, [#allocation4]
    $region21: #{tpu_custom_call.1} parent=1 // pred_fallthru
      _
    // Predicated region
    $region22: #{tpu_custom_call.1} parent=1 // pred_check
      _
    $region23: #{tpu_custom_call.1} parent=1 // pred_check_branch
      %58 = sbr.rel (0) target = $region25
    $region24: #{tpu_custom_call.1} parent=1 // pred_region
      %59 = dma.done [#allocation4], 256
    $region25: #{tpu_custom_call.1} parent=1 // pred_fallthru
      _
    %60 = vsyncpa [#allocation3], 1
    %61 = vsyncpa [#allocation4], 1
    %62 = vsyncpa [#allocation5], 1

</llo_original>
